<compile_context>
chip_gen: v6e
topology: v6e:2x2x1
jax: 0.10.0
libtpu: 0.0.40
codegen_flags: <defaults>
</compile_context>

<pallas_src>
import math
import jax
import jax.numpy as jnp
from jax.experimental import pallas as pl
from jax.experimental.pallas import tpu as pltpu

IN_F, HID_F, OUT_F = 4, 40, 2      # logical dims of NoisyNet2
IN_P, HID_P, OUT_P = 8, 128, 8     # padded dims used by the kernel (batch-on-lanes)
LANE = 128                         # lane width: batch tiles are multiples of this
MAX_TILE_B = 4096                  # max batch columns per grid step


def _round_up(x, m):
    return (x + m - 1) // m * m


def _cdiv(a, b):
    return -(-a // b)


# ----------------------------------------------------------------------------
# Pallas kernel:  o^T = W2 @ relu(W1 @ x^T + b1) + b2   on one batch tile
# (noise already folded into W1/b1/W2/b2 by the wrapper)
# ----------------------------------------------------------------------------
def noisy_mlp_kernel(xt_ref, w1_ref, b1_ref, w2_ref, b2_ref, ot_ref):
    xt = xt_ref[...]                                       # [IN_P, tile_b]
    h = jnp.dot(w1_ref[...], xt,
                preferred_element_type=jnp.float32) + b1_ref[...]   # [HID_P, tile_b]
    h = jnp.maximum(h, 0.0)                                # ReLU
    ot_ref[...] = (jnp.dot(w2_ref[...], h,
                           preferred_element_type=jnp.float32)
                   + b2_ref[...])                          # [OUT_P, tile_b]


def _pick_tiling(b):
    """1 grid step for small batches, 2 equal lane-aligned tiles otherwise."""
    b_pad = _round_up(max(b, 1), LANE)
    if b_pad <= 2 * LANE:
        tile_b = b_pad
    else:
        tile_b = min(_round_up(_cdiv(b_pad, 2), LANE), MAX_TILE_B)
    b_pad = _round_up(b_pad, tile_b)
    return b_pad, tile_b


# ----------------------------------------------------------------------------
# Forward wrapper: fold noise, transpose/pad x, grid over batch, slice back
# ----------------------------------------------------------------------------
@jax.jit
def noisy_net2_forward(x, params_p):
    """x: [B, 4] f32; params_p: 12-tuple of padded mu/sigma/eps tensors."""
    (w1_mu, w1_sg, w1_ep, b1_mu, b1_sg, b1_ep,
     w2_mu, w2_sg, w2_ep, b2_mu, b2_sg, b2_ep) = params_p

    # Fold factorized noise once per forward (tiny fused elementwise op).
    w1 = w1_mu + w1_sg * w1_ep        # [HID_P, IN_P]
    b1 = b1_mu + b1_sg * b1_ep        # [HID_P, 1]
    w2 = w2_mu + w2_sg * w2_ep        # [OUT_P, HID_P]
    b2 = b2_mu + b2_sg * b2_ep        # [OUT_P, 1]

    B = x.shape[0]
    B_pad, tile_b = _pick_tiling(B)

    # Batch on lanes: x^T, zero-padded to [IN_P, B_pad].
    xt = jnp.zeros((IN_P, B_pad), jnp.float32).at[:IN_F, :B].set(
        x.astype(jnp.float32).T)

    const = lambda shape: pl.BlockSpec(shape, lambda i: (0, 0))

    out_t = pl.pallas_call(
        noisy_mlp_kernel,
        out_shape=jax.ShapeDtypeStruct((OUT_P, B_pad), jnp.float32),
        grid=(B_pad // tile_b,),
        in_specs=[
            pl.BlockSpec((IN_P, tile_b), lambda i: (0, i)),   # x^T streams
            const((HID_P, IN_P)),                             # W1 resident
            const((HID_P, 1)),                                # b1 resident
            const((OUT_P, HID_P)),                            # W2 resident
            const((OUT_P, 1)),                                # b2 resident
        ],
        out_specs=pl.BlockSpec((OUT_P, tile_b), lambda i: (0, i)),  # o^T streams
        compiler_params=pltpu.CompilerParams(
            dimension_semantics=("parallel",)),
    )(xt, w1, b1, w2, b2)

    return out_t[:OUT_F, :B].T        # -> [B, 2]


# ----------------------------------------------------------------------------
# Deterministic parameter / noise construction (mirrors NoisyLinear)
# ----------------------------------------------------------------------------
def _scale_noise(key, n):
    x = jax.random.normal(key, (n,), dtype=jnp.float32)
    return jnp.sign(x) * jnp.sqrt(jnp.abs(x))


def make_noisy_linear(key, in_f, out_f, sigma_init=0.5):
    k_w, k_b, k_in, k_out = jax.random.split(key, 4)
    mu_range = 1.0 / math.sqrt(in_f)
    w_mu = jax.random.uniform(k_w, (out_f, in_f), minval=-mu_range,
                              maxval=mu_range, dtype=jnp.float32)
    b_mu = jax.random.uniform(k_b, (out_f,), minval=-mu_range,
                              maxval=mu_range, dtype=jnp.float32)
    w_sigma = jnp.full((out_f, in_f), sigma_init / math.sqrt(in_f), jnp.float32)
    b_sigma = jnp.full((out_f,), sigma_init / math.sqrt(in_f), jnp.float32)
    # factorized Gaussian noise (what .sample() would produce)
    eps_in = _scale_noise(k_in, in_f)
    eps_out = _scale_noise(k_out, out_f)
    return dict(w_mu=w_mu, w_sigma=w_sigma, w_eps=jnp.outer(eps_out, eps_in),
                b_mu=b_mu, b_sigma=b_sigma, b_eps=eps_out)


def _pad_mat(w, out_p, in_p):
    # torch layout [out, in] -> kernel layout [out_p, in_p], zero padded
    out_f, in_f = w.shape
    return jnp.zeros((out_p, in_p), jnp.float32).at[:out_f, :in_f].set(w)


def _pad_vec(b, out_p):
    return jnp.zeros((out_p, 1), jnp.float32).at[:b.shape[0], 0].set(b)


def pack_params(l1, l2):
    """Pad mu/sigma/eps of both layers into the kernel's transposed layout.

    Mu/sigma/eps are all zero-padded, so padded rows/cols of the effective
    weights are exactly zero regardless of the noise values.
    """
    return (
        _pad_mat(l1["w_mu"], HID_P, IN_P),
        _pad_mat(l1["w_sigma"], HID_P, IN_P),
        _pad_mat(l1["w_eps"], HID_P, IN_P),
        _pad_vec(l1["b_mu"], HID_P),
        _pad_vec(l1["b_sigma"], HID_P),
        _pad_vec(l1["b_eps"], HID_P),
        _pad_mat(l2["w_mu"], OUT_P, HID_P),
        _pad_mat(l2["w_sigma"], OUT_P, HID_P),
        _pad_mat(l2["w_eps"], OUT_P, HID_P),
        _pad_vec(l2["b_mu"], OUT_P),
        _pad_vec(l2["b_sigma"], OUT_P),
        _pad_vec(l2["b_eps"], OUT_P),
    )


def reference_forward(x, l1, l2):
    w1 = l1["w_mu"] + l1["w_sigma"] * l1["w_eps"]
    b1 = l1["b_mu"] + l1["b_sigma"] * l1["b_eps"]
    w2 = l2["w_mu"] + l2["w_sigma"] * l2["w_eps"]
    b2 = l2["b_mu"] + l2["b_sigma"] * l2["b_eps"]
    h = jnp.maximum(x @ w1.T + b1, 0.0)
    return h @ w2.T + b2


if __name__ == "__main__":
    root = jax.random.PRNGKey(0)
    k_x, k_fc1, k_fc2, k_big = jax.random.split(root, 4)

    fc1 = make_noisy_linear(k_fc1, IN_F, HID_F)
    fc2 = make_noisy_linear(k_fc2, HID_F, OUT_F)
    params_p = pack_params(fc1, fc2)

    # Small CartPole-sized batch (state dim = 4) -> single grid step.
    B = 2
    x = jax.random.normal(k_x, (B, IN_F), dtype=jnp.float32)
    y = jax.block_until_ready(noisy_net2_forward(x, params_p))
    y_ref = reference_forward(x, fc1, fc2)
    assert y.shape == (B, OUT_F)
    assert jnp.allclose(y, y_ref, atol=1e-5, rtol=1e-5)

    # Larger replay-style batch -> two equal lane-aligned tiles (768 each).
    Bb = 1500
    xb = jax.random.normal(k_big, (Bb, IN_F), dtype=jnp.float32)
    yb = jax.block_until_ready(noisy_net2_forward(xb, params_p))
    yb_ref = reference_forward(xb, fc1, fc2)
    assert yb.shape == (Bb, OUT_F)
    assert jnp.allclose(yb, yb_ref, atol=1e-4, rtol=1e-4)

    print("KERNEL_OK")
</pallas_src>

<mosaic_0001>
module attributes {stable_mosaic.version = 11 : i64} {
  func.func @noisy_mlp_kernel(%arg0: i32, %arg1: memref<8x128xf32, #tpu.memory_space<vmem>>, %arg2: memref<128x8xf32, #tpu.memory_space<vmem>>, %arg3: memref<128x1xf32, #tpu.memory_space<vmem>>, %arg4: memref<8x128xf32, #tpu.memory_space<vmem>>, %arg5: memref<8x1xf32, #tpu.memory_space<vmem>>, %arg6: memref<8x128xf32, #tpu.memory_space<vmem>>) attributes {dimension_semantics = [#tpu.dimension_semantics<parallel>], iteration_bounds = array<i64: 1>, scalar_prefetch = 0 : i64, scratch_operands = 0 : i64, tpu.core_type = #tpu.core_type<tc>, window_params = [{transform_indices = @transform_0, window_bounds = array<i64: 8, 128>}, {pipeline_mode = #tpu.pipeline_mode<synchronous>, transform_indices = @transform_1, window_bounds = array<i64: 128, 8>}, {pipeline_mode = #tpu.pipeline_mode<synchronous>, transform_indices = @transform_2, window_bounds = array<i64: 128, 1>}, {pipeline_mode = #tpu.pipeline_mode<synchronous>, transform_indices = @transform_3, window_bounds = array<i64: 8, 128>}, {pipeline_mode = #tpu.pipeline_mode<synchronous>, transform_indices = @transform_4, window_bounds = array<i64: 8, 1>}, {transform_indices = @transform_5, window_bounds = array<i64: 8, 128>}]} {
    %c0 = arith.constant 0 : index
    %c0_0 = arith.constant 0 : index
    %0 = vector.load %arg1[%c0, %c0_0] : memref<8x128xf32, #tpu.memory_space<vmem>>, vector<8x128xf32>
    %c0_1 = arith.constant 0 : index
    %c0_2 = arith.constant 0 : index
    %1 = vector.load %arg2[%c0_1, %c0_2] : memref<128x8xf32, #tpu.memory_space<vmem>>, vector<128x8xf32>
    %cst = arith.constant dense<0.000000e+00> : vector<128x128xf32>
    %2 = tpu.matmul %1, %0, %cst {dimension_numbers = #tpu.dot_dimension_numbers<[1], [0], [0], [1], [0, 0, 1, 1], [], []>} : vector<128x8xf32>, vector<8x128xf32>, vector<128x128xf32> -> vector<128x128xf32>
    %c0_3 = arith.constant 0 : index
    %c0_4 = arith.constant 0 : index
    %3 = vector.load %arg3[%c0_3, %c0_4] : memref<128x1xf32, #tpu.memory_space<vmem>>, vector<128x1xf32>
    %4 = vector.broadcast %3 : vector<128x1xf32> to vector<128x128xf32>
    %5 = arith.addf %2, %4 : vector<128x128xf32>
    %cst_5 = arith.constant 0.000000e+00 : f32
    %6 = vector.broadcast %cst_5 : f32 to vector<128x128xf32>
    %7 = arith.maximumf %5, %6 : vector<128x128xf32>
    %c0_6 = arith.constant 0 : index
    %c0_7 = arith.constant 0 : index
    %8 = vector.load %arg4[%c0_6, %c0_7] : memref<8x128xf32, #tpu.memory_space<vmem>>, vector<8x128xf32>
    %cst_8 = arith.constant dense<0.000000e+00> : vector<8x128xf32>
    %9 = tpu.matmul %8, %7, %cst_8 {dimension_numbers = #tpu.dot_dimension_numbers<[1], [0], [0], [1], [0, 0, 1, 1], [], []>} : vector<8x128xf32>, vector<128x128xf32>, vector<8x128xf32> -> vector<8x128xf32>
    %c0_9 = arith.constant 0 : index
    %c0_10 = arith.constant 0 : index
    %10 = vector.load %arg5[%c0_9, %c0_10] : memref<8x1xf32, #tpu.memory_space<vmem>>, vector<8x1xf32>
    %11 = vector.broadcast %10 : vector<8x1xf32> to vector<8x128xf32>
    %12 = arith.addf %9, %11 : vector<8x128xf32>
    %c0_11 = arith.constant 0 : index
    %c0_12 = arith.constant 0 : index
    %13 = vector.load %arg6[%c0_11, %c0_12] : memref<8x128xf32, #tpu.memory_space<vmem>>, vector<8x128xf32>
    tpu.vector_store %arg6[%c0_11, %c0_12], %12 {strides = array<i32>} : memref<8x128xf32, #tpu.memory_space<vmem>>, vector<8x128xf32>,
    return
  }
  func.func @transform_0(%arg0: i32) -> (i32, i32) {
    %c0_i32 = arith.constant 0 : i32
    %c0_i32_0 = arith.constant 0 : i32
    return %c0_i32, %arg0 : i32, i32
  }
  func.func @transform_1(%arg0: i32) -> (i32, i32) {
    %c0_i32 = arith.constant 0 : i32
    %c0_i32_0 = arith.constant 0 : i32
    %c0_i32_1 = arith.constant 0 : i32
    return %c0_i32, %c0_i32_0 : i32, i32
  }
  func.func @transform_2(%arg0: i32) -> (i32, i32) {
    %c0_i32 = arith.constant 0 : i32
    %c0_i32_0 = arith.constant 0 : i32
    %c0_i32_1 = arith.constant 0 : i32
    return %c0_i32, %c0_i32_0 : i32, i32
  }
  func.func @transform_3(%arg0: i32) -> (i32, i32) {
    %c0_i32 = arith.constant 0 : i32
    %c0_i32_0 = arith.constant 0 : i32
    %c0_i32_1 = arith.constant 0 : i32
    return %c0_i32, %c0_i32_0 : i32, i32
  }
  func.func @transform_4(%arg0: i32) -> (i32, i32) {
    %c0_i32 = arith.constant 0 : i32
    %c0_i32_0 = arith.constant 0 : i32
    %c0_i32_1 = arith.constant 0 : i32
    return %c0_i32, %c0_i32_0 : i32, i32
  }
  func.func @transform_5(%arg0: i32) -> (i32, i32) {
    %c0_i32 = arith.constant 0 : i32
    %c0_i32_0 = arith.constant 0 : i32
    return %c0_i32, %arg0 : i32, i32
  }
}

</mosaic_0001>

<llo_original>
// kernel: mul.5
$region0: #{mul.5}
  #allocation0 [shape = 's32[1]{0}', space=sflag, size = 0x4, scoped, tag = 'scoped memory for mul.5']
  %s0 = inlined_call_operand.vmem [shape: f32[128,1], index: 0, kind: input, shape index: {}]
  %s1 = inlined_call_operand.vmem [shape: f32[128,1], index: 1, kind: input, shape index: {}]
  %s2 = inlined_call_operand.vmem [shape: f32[128,1], index: 2, kind: output, shape index: {}]
  %v3 = vld [vmem:[%s0] sm:$0x1]
  %v4 = vld [vmem:[%s1] sm:$0x1]
  %5 = xla_tuple %v3, %v4
  %6 = xla_tuple %5
  %v7 = vmul.f32 %v3, %v4
  %8 = xla_tuple %v7
  %9 = vst [vmem:[%s2] sm:$0x1] %v7

// kernel: mul.4
$region0: #{mul.4}
  #allocation0 [shape = 's32[1]{0}', space=sflag, size = 0x4, scoped, tag = 'scoped memory for mul.4']
  %s0 = inlined_call_operand.vmem [shape: f32[128,8], index: 0, kind: input, shape index: {}]
  %s1 = inlined_call_operand.vmem [shape: f32[128,8], index: 1, kind: input, shape index: {}]
  %s2 = inlined_call_operand.vmem [shape: f32[128,8], index: 2, kind: output, shape index: {}]
  %v3 = vld [vmem:[%s0] sm:$0xff]
  %v4 = vld [vmem:[%s1] sm:$0xff]
  %5 = xla_tuple %v3, %v4
  %6 = xla_tuple %5
  %v7 = vmul.f32 %v3, %v4
  %8 = xla_tuple %v7
  %9 = vst [vmem:[%s2] sm:$0xff] %v7

// kernel: noisy_net2_forward.1
$region0: #{noisy_net2_forward.1}
  #allocation0 [shape = 'u32[]', space=smem, size = 0x4, offset = 0x4, fixed_abs, tag = 'smem constant byte address 0x4 - core index']
  #allocation1 [shape = 'u32[144,128]{1,0:T(1,128)}', space=vmem, size = 0x12000, scoped, tag = 'internal scratch']
  %s0 = inlined_call_operand.vmem [shape: f32[8,128], index: 0, kind: input, shape index: {}]
  %s1 = inlined_call_operand.vmem [shape: f32[128,8], index: 1, kind: input, shape index: {}]
  %s2 = inlined_call_operand.vmem [shape: f32[128,1], index: 2, kind: input, shape index: {}]
  %s3 = inlined_call_operand.vmem [shape: f32[8,128], index: 3, kind: input, shape index: {}]
  %s4 = inlined_call_operand.vmem [shape: f32[8,1], index: 4, kind: input, shape index: {}]
  %s5 = inlined_call_operand.vmem [shape: f32[8,128], index: 5, kind: output, shape index: {}]
  %s6 = sld [smem:[#allocation0]]
  $region30: #{noisy_net2_forward.1} parent=0
    _
  %s8 = ssub.s32 1, %s6
  %s9 = scalar_select 0, %s8, %s6
  // Predicated region
  $region2: #{noisy_net2_forward.1} parent=0 // pred_check
    _
  $region3: #{noisy_net2_forward.1} parent=0 // pred_check_branch
    %11 = sbr.rel (0) target = $region5
  $region4: #{noisy_net2_forward.1} parent=0 // pred_region
    _
  $region5: #{noisy_net2_forward.1} parent=0 // pred_fallthru
    _
  // Predicated region
  $region6: #{noisy_net2_forward.1} parent=0 // pred_check
    _
  $region7: #{noisy_net2_forward.1} parent=0 // pred_check_branch
    %13 = sbr.rel (0) target = $region9
  $region8: #{noisy_net2_forward.1} parent=0 // pred_region
    _
  $region9: #{noisy_net2_forward.1} parent=0 // pred_fallthru
    _
  // Predicated region
  $region10: #{noisy_net2_forward.1} parent=0 // pred_check
    _
  $region11: #{noisy_net2_forward.1} parent=0 // pred_check_branch
    %15 = sbr.rel (0) target = $region13
  $region12: #{noisy_net2_forward.1} parent=0 // pred_region
    _
  $region13: #{noisy_net2_forward.1} parent=0 // pred_fallthru
    _
  // Predicated region
  $region14: #{noisy_net2_forward.1} parent=0 // pred_check
    _
  $region15: #{noisy_net2_forward.1} parent=0 // pred_check_branch
    %17 = sbr.rel (0) target = $region17
  $region16: #{noisy_net2_forward.1} parent=0 // pred_region
    _
  $region17: #{noisy_net2_forward.1} parent=0 // pred_fallthru
    _
  // Predicated region
  $region18: #{noisy_net2_forward.1} parent=0 // pred_check
    _
  $region19: #{noisy_net2_forward.1} parent=0 // pred_check_branch
    %19 = sbr.rel (0) target = $region21
  $region20: #{noisy_net2_forward.1} parent=0 // pred_region
    _
  $region21: #{noisy_net2_forward.1} parent=0 // pred_fallthru
    _
  %v20 = vld [vmem:[%s0] sm:$0xff]
  %v21 = vld [vmem:[%s1] sm:$0xff]
  %v22 = vld [vmem:[%s1 + $0x8] sm:$0xff]
  %v23 = vld [vmem:[%s1 + $0x10] sm:$0xff]
  %v24 = vld [vmem:[%s1 + $0x18] sm:$0xff]
  %v25 = vld [vmem:[%s1 + $0x20] sm:$0xff]
  %v26 = vld [vmem:[%s1 + $0x28] sm:$0xff]
  %v27 = vld [vmem:[%s1 + $0x30] sm:$0xff]
  %v28 = vld [vmem:[%s1 + $0x38] sm:$0xff]
  %v29 = vld [vmem:[%s1 + $0x40] sm:$0xff]
  %v30 = vld [vmem:[%s1 + $0x48] sm:$0xff]
  %v31 = vld [vmem:[%s1 + $0x50] sm:$0xff]
  %v32 = vld [vmem:[%s1 + $0x58] sm:$0xff]
  %v33 = vld [vmem:[%s1 + $0x60] sm:$0xff]
  %v34 = vld [vmem:[%s1 + $0x68] sm:$0xff]
  %v35 = vld [vmem:[%s1 + $0x70] sm:$0xff]
  %v36 = vld [vmem:[%s1 + $0x78] sm:$0xff]
  %v37 = vld [vmem:[%s2] sm:$0xff]
  %v38 = vld [vmem:[%s2 + $0x8] sm:$0xff]
  %v39 = vld [vmem:[%s2 + $0x10] sm:$0xff]
  %v40 = vld [vmem:[%s2 + $0x18] sm:$0xff]
  %v41 = vld [vmem:[%s2 + $0x20] sm:$0xff]
  %v42 = vld [vmem:[%s2 + $0x28] sm:$0xff]
  %v43 = vld [vmem:[%s2 + $0x30] sm:$0xff]
  %v44 = vld [vmem:[%s2 + $0x38] sm:$0xff]
  %v45 = vld [vmem:[%s2 + $0x40] sm:$0xff]
  %v46 = vld [vmem:[%s2 + $0x48] sm:$0xff]
  %v47 = vld [vmem:[%s2 + $0x50] sm:$0xff]
  %v48 = vld [vmem:[%s2 + $0x58] sm:$0xff]
  %v49 = vld [vmem:[%s2 + $0x60] sm:$0xff]
  %v50 = vld [vmem:[%s2 + $0x68] sm:$0xff]
  %v51 = vld [vmem:[%s2 + $0x70] sm:$0xff]
  %v52 = vld [vmem:[%s2 + $0x78] sm:$0xff]
  %54 = vset.pattern.permute.xlu0 0
  %55 = vperm.xlu0 %54, %v37
  %v56 = vpop.permute.xlu0 %55
  %59 = vset.pattern.permute.xlu0 0
  %60 = vperm.xlu0 %59, %v38
  %v61 = vpop.permute.xlu0 %60
  %64 = vset.pattern.permute.xlu0 0
  %65 = vperm.xlu0 %64, %v39
  %v66 = vpop.permute.xlu0 %65
  %69 = vset.pattern.permute.xlu0 0
  %70 = vperm.xlu0 %69, %v40
  %v71 = vpop.permute.xlu0 %70
  %74 = vset.pattern.permute.xlu0 0
  %75 = vperm.xlu0 %74, %v41
  %v76 = vpop.permute.xlu0 %75
  %79 = vset.pattern.permute.xlu0 0
  %80 = vperm.xlu0 %79, %v42
  %v81 = vpop.permute.xlu0 %80
  %84 = vset.pattern.permute.xlu0 0
  %85 = vperm.xlu0 %84, %v43
  %v86 = vpop.permute.xlu0 %85
  %89 = vset.pattern.permute.xlu0 0
  %90 = vperm.xlu0 %89, %v44
  %v91 = vpop.permute.xlu0 %90
  %94 = vset.pattern.permute.xlu0 0
  %95 = vperm.xlu0 %94, %v45
  %v96 = vpop.permute.xlu0 %95
  %99 = vset.pattern.permute.xlu0 0
  %100 = vperm.xlu0 %99, %v46
  %v101 = vpop.permute.xlu0 %100
  %104 = vset.pattern.permute.xlu0 0
  %105 = vperm.xlu0 %104, %v47
  %v106 = vpop.permute.xlu0 %105
  %109 = vset.pattern.permute.xlu0 0
  %110 = vperm.xlu0 %109, %v48
  %v111 = vpop.permute.xlu0 %110
  %114 = vset.pattern.permute.xlu0 0
  %115 = vperm.xlu0 %114, %v49
  %v116 = vpop.permute.xlu0 %115
  %119 = vset.pattern.permute.xlu0 0
  %120 = vperm.xlu0 %119, %v50
  %v121 = vpop.permute.xlu0 %120
  %124 = vset.pattern.permute.xlu0 0
  %125 = vperm.xlu0 %124, %v51
  %v126 = vpop.permute.xlu0 %125
  %129 = vset.pattern.permute.xlu0 0
  %130 = vperm.xlu0 %129, %v52
  %v131 = vpop.permute.xlu0 %130
  %vm133 = vcmask 64512
  %v135 = vsel %vm133, %v21, 0
  %v138 = vsel %vm133, %v22, 0
  %v141 = vsel %vm133, %v23, 0
  %v144 = vsel %vm133, %v24, 0
  %v147 = vsel %vm133, %v25, 0
  %v150 = vsel %vm133, %v26, 0
  %v153 = vsel %vm133, %v27, 0
  %v156 = vsel %vm133, %v28, 0
  %v159 = vsel %vm133, %v29, 0
  %v162 = vsel %vm133, %v30, 0
  %v165 = vsel %vm133, %v31, 0
  %v168 = vsel %vm133, %v32, 0
  %v171 = vsel %vm133, %v33, 0
  %v174 = vsel %vm133, %v34, 0
  %v177 = vsel %vm133, %v35, 0
  %v180 = vsel %vm133, %v36, 0
  %182 = vmatprep.subr.mxu0 0.0
  %183 = vmatpush1.msra.mxu0 0.0
  %184 = vmatprep.subr.mxu0 0.0
  %185 = vmatpush1.msra.mxu0 0.0
  %186 = vmatprep.subr.mxu0 0.0
  %187 = vmatpush1.msra.mxu0 0.0
  %188 = vmatprep.subr.mxu0 0.0
  %189 = vmatpush1.msra.mxu0 0.0
  %190 = vmatprep.subr.mxu0 0.0
  %191 = vmatpush1.msra.mxu0 0.0
  %192 = vmatprep.subr.mxu0 0.0
  %193 = vmatpush1.msra.mxu0 0.0
  %194 = vmatprep.subr.mxu0 0.0
  %195 = vmatpush1.msra.mxu0 0.0
  %196 = vmatprep.subr.mxu0 0.0
  %197 = vmatpush1.msra.mxu0 0.0
  %198 = vmatprep.subr.mxu0 0.0
  %199 = vmatpush1.msra.mxu0 0.0
  %200 = vmatprep.subr.mxu0 0.0
  %201 = vmatpush1.msra.mxu0 0.0
  %202 = vmatprep.subr.mxu0 0.0
  %203 = vmatpush1.msra.mxu0 0.0
  %204 = vmatprep.subr.mxu0 0.0
  %205 = vmatpush1.msra.mxu0 0.0
  %206 = vmatprep.subr.mxu0 0.0
  %207 = vmatpush1.msra.mxu0 0.0
  %208 = vmatprep.subr.mxu0 0.0
  %209 = vmatpush1.msra.mxu0 0.0
  %210 = vmatprep.subr.mxu0 0.0
  %211 = vmatpush1.msra.mxu0 0.0
  %212 = vmatprep.subr.mxu0 0.0
  %213 = vmatpush1.msra.mxu0 %v20
  %214 = vmatprep.subr.mxu0 0.0
  %215 = vmatpush2.msra.mxu0 0.0
  %216 = vmatprep.subr.mxu0 0.0
  %217 = vmatpush2.msra.mxu0 0.0
  %218 = vmatprep.subr.mxu0 0.0
  %219 = vmatpush2.msra.mxu0 0.0
  %220 = vmatprep.subr.mxu0 0.0
  %221 = vmatpush2.msra.mxu0 0.0
  %222 = vmatprep.subr.mxu0 0.0
  %223 = vmatpush2.msra.mxu0 0.0
  %224 = vmatprep.subr.mxu0 0.0
  %225 = vmatpush2.msra.mxu0 0.0
  %226 = vmatprep.subr.mxu0 0.0
  %227 = vmatpush2.msra.mxu0 0.0
  %228 = vmatprep.subr.mxu0 0.0
  %229 = vmatpush2.msra.mxu0 0.0
  %230 = vmatprep.subr.mxu0 0.0
  %231 = vmatpush2.msra.mxu0 0.0
  %232 = vmatprep.subr.mxu0 0.0
  %233 = vmatpush2.msra.mxu0 0.0
  %234 = vmatprep.subr.mxu0 0.0
  %235 = vmatpush2.msra.mxu0 0.0
  %236 = vmatprep.subr.mxu0 0.0
  %237 = vmatpush2.msra.mxu0 0.0
  %238 = vmatprep.subr.mxu0 0.0
  %239 = vmatpush2.msra.mxu0 0.0
  %240 = vmatprep.subr.mxu0 0.0
  %241 = vmatpush2.msra.mxu0 0.0
  %242 = vmatprep.subr.mxu0 0.0
  %243 = vmatpush2.msra.mxu0 0.0
  %244 = vmatprep.subr.mxu0 0.0
  %245 = vmatpush2.msra.mxu0 0.0
  %246 = vmatprep.mubr.f32.mxu0 0.0
  %247 = vmatmul.mubr.f32.gmra.mxu0 %v135
  %v248 = vpop.f32.mrf.mxu0
  %v249 = vadd.f32 %v56, %v248
  %v250 = vpop.f32.mrf.mxu0
  %251 = vmatprep.mubr.f32.mxu0 0.0
  %252 = vmatmul.mubr.f32.gmra.mxu0 %v138
  %v253 = vpop.f32.mrf.mxu0
  %v254 = vadd.f32 %v61, %v253
  %v255 = vpop.f32.mrf.mxu0
  %256 = vmatprep.mubr.f32.mxu0 0.0
  %257 = vmatmul.mubr.f32.gmra.mxu0 %v141
  %v258 = vpop.f32.mrf.mxu0
  %v259 = vadd.f32 %v66, %v258
  %v260 = vpop.f32.mrf.mxu0
  %261 = vmatprep.mubr.f32.mxu0 0.0
  %262 = vmatmul.mubr.f32.gmra.mxu0 %v144
  %v263 = vpop.f32.mrf.mxu0
  %v264 = vadd.f32 %v71, %v263
  %v265 = vpop.f32.mrf.mxu0
  %266 = vmatprep.mubr.f32.mxu0 0.0
  %267 = vmatmul.mubr.f32.gmra.mxu0 %v147
  %v268 = vpop.f32.mrf.mxu0
  %v269 = vadd.f32 %v76, %v268
  %v270 = vpop.f32.mrf.mxu0
  %271 = vmatprep.mubr.f32.mxu0 0.0
  %272 = vmatmul.mubr.f32.gmra.mxu0 %v150
  %v273 = vpop.f32.mrf.mxu0
  %v274 = vadd.f32 %v81, %v273
  %v275 = vpop.f32.mrf.mxu0
  %276 = vmatprep.mubr.f32.mxu0 0.0
  %277 = vmatmul.mubr.f32.gmra.mxu0 %v153
  %v278 = vpop.f32.mrf.mxu0
  %v279 = vadd.f32 %v86, %v278
  %v280 = vpop.f32.mrf.mxu0
  %281 = vmatprep.mubr.f32.mxu0 0.0
  %282 = vmatmul.mubr.f32.gmra.mxu0 %v156
  %v283 = vpop.f32.mrf.mxu0
  %v284 = vadd.f32 %v91, %v283
  %v285 = vpop.f32.mrf.mxu0
  %286 = vmatprep.mubr.f32.mxu0 0.0
  %287 = vmatmul.mubr.f32.gmra.mxu0 %v159
  %v288 = vpop.f32.mrf.mxu0
  %v289 = vadd.f32 %v96, %v288
  %v290 = vpop.f32.mrf.mxu0
  %291 = vmatprep.mubr.f32.mxu0 0.0
  %292 = vmatmul.mubr.f32.gmra.mxu0 %v162
  %v293 = vpop.f32.mrf.mxu0
  %v294 = vadd.f32 %v101, %v293
  %v295 = vpop.f32.mrf.mxu0
  %296 = vmatprep.mubr.f32.mxu0 0.0
  %297 = vmatmul.mubr.f32.gmra.mxu0 %v165
  %v298 = vpop.f32.mrf.mxu0
  %v299 = vadd.f32 %v106, %v298
  %v300 = vpop.f32.mrf.mxu0
  %301 = vmatprep.mubr.f32.mxu0 0.0
  %302 = vmatmul.mubr.f32.gmra.mxu0 %v168
  %v303 = vpop.f32.mrf.mxu0
  %v304 = vadd.f32 %v111, %v303
  %v305 = vpop.f32.mrf.mxu0
  %306 = vmatprep.mubr.f32.mxu0 0.0
  %307 = vmatmul.mubr.f32.gmra.mxu0 %v171
  %v308 = vpop.f32.mrf.mxu0
  %v309 = vadd.f32 %v116, %v308
  %v310 = vpop.f32.mrf.mxu0
  %311 = vmatprep.mubr.f32.mxu0 0.0
  %312 = vmatmul.mubr.f32.gmra.mxu0 %v174
  %v313 = vpop.f32.mrf.mxu0
  %v314 = vadd.f32 %v121, %v313
  %v315 = vpop.f32.mrf.mxu0
  %316 = vmatprep.mubr.f32.mxu0 0.0
  %317 = vmatmul.mubr.f32.gmra.mxu0 %v177
  %v318 = vpop.f32.mrf.mxu0
  %v319 = vadd.f32 %v126, %v318
  %v320 = vpop.f32.mrf.mxu0
  %321 = vmatprep.mubr.f32.mxu0 0.0
  %322 = vmatmul.mubr.f32.gmra.mxu0 %v180
  %v323 = vpop.f32.mrf.mxu0
  %v324 = vadd.f32 %v131, %v323
  %v325 = vpop.f32.mrf.mxu0
  %326 = vdwg.mxu0
  %v327 = vmax.f32 %v249, 0.0
  %v328 = vmax.f32 %v254, 0.0
  %v329 = vmax.f32 %v259, 0.0
  %v330 = vmax.f32 %v264, 0.0
  %v331 = vmax.f32 %v269, 0.0
  %v332 = vmax.f32 %v274, 0.0
  %v333 = vmax.f32 %v279, 0.0
  %v334 = vmax.f32 %v284, 0.0
  %v335 = vmax.f32 %v289, 0.0
  %v336 = vmax.f32 %v294, 0.0
  %v337 = vmax.f32 %v299, 0.0
  %v338 = vmax.f32 %v304, 0.0
  %v339 = vmax.f32 %v309, 0.0
  %v340 = vmax.f32 %v314, 0.0
  %v341 = vmax.f32 %v319, 0.0
  %v342 = vmax.f32 %v324, 0.0
  %v343 = vld [vmem:[%s3] sm:$0xff]
  %v344 = vld [vmem:[%s4] sm:$0xff]
  %346 = vset.pattern.permute.xlu0 0
  %347 = vperm.xlu0 %346, %v344
  %v348 = vpop.permute.xlu0 %347
  %350 = vmatprep.subr.mxu0 0.0
  %351 = vmatpush1.msra.mxu0 %v342
  %352 = vmatprep.subr.mxu0 0.0
  %353 = vmatpush1.msra.mxu0 %v341
  %354 = vmatprep.subr.mxu0 0.0
  %355 = vmatpush1.msra.mxu0 %v340
  %356 = vmatprep.subr.mxu0 0.0
  %357 = vmatpush1.msra.mxu0 %v339
  %358 = vmatprep.subr.mxu0 0.0
  %359 = vmatpush1.msra.mxu0 %v338
  %360 = vmatprep.subr.mxu0 0.0
  %361 = vmatpush1.msra.mxu0 %v337
  %362 = vmatprep.subr.mxu0 0.0
  %363 = vmatpush1.msra.mxu0 %v336
  %364 = vmatprep.subr.mxu0 0.0
  %365 = vmatpush1.msra.mxu0 %v335
  %366 = vmatprep.subr.mxu0 0.0
  %367 = vmatpush1.msra.mxu0 %v334
  %368 = vmatprep.subr.mxu0 0.0
  %369 = vmatpush1.msra.mxu0 %v333
  %370 = vmatprep.subr.mxu0 0.0
  %371 = vmatpush1.msra.mxu0 %v332
  %372 = vmatprep.subr.mxu0 0.0
  %373 = vmatpush1.msra.mxu0 %v331
  %374 = vmatprep.subr.mxu0 0.0
  %375 = vmatpush1.msra.mxu0 %v330
  %376 = vmatprep.subr.mxu0 0.0
  %377 = vmatpush1.msra.mxu0 %v329
  %378 = vmatprep.subr.mxu0 0.0
  %379 = vmatpush1.msra.mxu0 %v328
  %380 = vmatprep.subr.mxu0 0.0
  %381 = vmatpush1.msra.mxu0 %v327
  %382 = vmatprep.subr.mxu0 0.0
  %383 = vmatpush2.msra.mxu0 0.0
  %384 = vmatprep.subr.mxu0 0.0
  %385 = vmatpush2.msra.mxu0 0.0
  %386 = vmatprep.subr.mxu0 0.0
  %387 = vmatpush2.msra.mxu0 0.0
  %388 = vmatprep.subr.mxu0 0.0
  %389 = vmatpush2.msra.mxu0 0.0
  %390 = vmatprep.subr.mxu0 0.0
  %391 = vmatpush2.msra.mxu0 0.0
  %392 = vmatprep.subr.mxu0 0.0
  %393 = vmatpush2.msra.mxu0 0.0
  %394 = vmatprep.subr.mxu0 0.0
  %395 = vmatpush2.msra.mxu0 0.0
  %396 = vmatprep.subr.mxu0 0.0
  %397 = vmatpush2.msra.mxu0 0.0
  %398 = vmatprep.subr.mxu0 0.0
  %399 = vmatpush2.msra.mxu0 0.0
  %400 = vmatprep.subr.mxu0 0.0
  %401 = vmatpush2.msra.mxu0 0.0
  %402 = vmatprep.subr.mxu0 0.0
  %403 = vmatpush2.msra.mxu0 0.0
  %404 = vmatprep.subr.mxu0 0.0
  %405 = vmatpush2.msra.mxu0 0.0
  %406 = vmatprep.subr.mxu0 0.0
  %407 = vmatpush2.msra.mxu0 0.0
  %408 = vmatprep.subr.mxu0 0.0
  %409 = vmatpush2.msra.mxu0 0.0
  %410 = vmatprep.subr.mxu0 0.0
  %411 = vmatpush2.msra.mxu0 0.0
  %412 = vmatprep.subr.mxu0 0.0
  %413 = vmatpush2.msra.mxu0 0.0
  %414 = vmatprep.mubr.f32.mxu0 0.0
  %415 = vmatmul.mubr.f32.gmra.mxu0 %v343
  %v416 = vpop.f32.mrf.mxu0
  %v417 = vadd.f32 %v348, %v416
  %v418 = vpop.f32.mrf.mxu0
  %419 = vdwg.mxu0
  %420 = vst [vmem:[%s5] sm:$0xff] %v417
  // Predicated region
  $region22: #{noisy_net2_forward.1} parent=0 // pred_check
    _
  $region23: #{noisy_net2_forward.1} parent=0 // pred_check_branch
    %422 = sbr.rel (0) target = $region25
  $region24: #{noisy_net2_forward.1} parent=0 // pred_region
    _
  $region25: #{noisy_net2_forward.1} parent=0 // pred_fallthru
    _
  // Predicated region
  $region26: #{noisy_net2_forward.1} parent=0 // pred_check
    _
  $region27: #{noisy_net2_forward.1} parent=0 // pred_check_branch
    %424 = sbr.rel (0) target = $region29
  $region28: #{noisy_net2_forward.1} parent=0 // pred_region
    _
  $region29: #{noisy_net2_forward.1} parent=0 // pred_fallthru
    _

</llo_original>
